<compile_context>
chip_gen: v7x
topology: tpu7x:2x2x1
jax: 0.10.0
libtpu: 0.0.40
codegen_flags: <defaults>
</compile_context>

<pallas_src>
import functools

import jax
import jax.numpy as jnp
from jax.experimental import pallas as pl
from jax.experimental.pallas import tpu as pltpu


def _round_up(x, m):
    return (x + m - 1) // m * m


def _sublane_multiple(itemsize):
    # vregs pack sub-32-bit dtypes along sublanes: f32 -> 8, bf16/f16 -> 16, i8 -> 32.
    return max(8, 32 // max(itemsize, 1))


def _chip_config():
    """Best-effort (vmem_budget_bytes, vmem_limit_bytes, tensorcores_per_chip)."""
    kind = ""
    try:
        kind = jax.devices()[0].device_kind.lower()
    except Exception:
        pass
    vmem = None
    try:
        vmem = int(pltpu.get_tpu_info().vmem_capacity_bytes)
    except Exception:
        pass
    is_v7 = ("v7" in kind) or (vmem is not None and vmem <= 64 * 1024 * 1024)
    if is_v7:
        # v7x: 64 MiB VMEM per TC (32 MiB scoped default), 2 TensorCores/chip.
        return 24 * 1024 * 1024, 32 * 1024 * 1024, 2
    # v5e / v6e: 128 MiB VMEM, 1 TensorCore/chip.
    return 48 * 1024 * 1024, 64 * 1024 * 1024, 1


def _pick_block_rows(n_rows, hidden, itemsize, budget_bytes, cores):
    """Largest VMEM-budgeted row tile; 0 means 'use the split-H fallback'."""
    sub = _sublane_multiple(itemsize)
    # Double-buffered input + double-buffered output; an extra f32 working tile
    # is only needed for the upcast path on sub-f32 inputs.
    per_row = hidden * (2 * itemsize + 2 * itemsize)
    if itemsize < 4:
        per_row += hidden * 4
    br = (budget_bytes // max(per_row, 1)) // sub * sub
    if br < sub:
        return 0  # even a minimal (sub, H) tile does not fit -> split H
    br = min(br, _round_up(n_rows, sub))
    if cores > 1 and n_rows > sub:
        # Keep >= `cores` grid steps so the row axis can be sharded across
        # TensorCores (v7x megacore). On single-core chips we keep one big tile.
        br = min(br, max(sub, _round_up(pl.cdiv(n_rows, cores), sub)))
    return max(sub, br)


# --------------------------------------------------------------------------- #
# Single-pass kernel (hidden axis fits in one block)
# --------------------------------------------------------------------------- #
def _rmsnorm_kernel(x_ref, w_ref, o_ref, *, eps):
    # x_ref: (block_rows, H), w_ref: (1, H), o_ref: (block_rows, H)
    xf = x_ref[...].astype(jnp.float32)
    ms = jnp.mean(xf * xf, axis=-1, keepdims=True)   # XLU row reduce, f32 acc
    inv = jax.lax.rsqrt(ms + eps)                    # EUP slot, ~free
    o_ref[...] = (xf * inv * w_ref[...].astype(jnp.float32)).astype(o_ref.dtype)


# --------------------------------------------------------------------------- #
# Split-H fallback kernels (hidden axis too large for one VMEM block)
# --------------------------------------------------------------------------- #
def _sumsq_kernel(x_ref, ss_ref, *, hidden, h_block):
    j = pl.program_id(1)

    @pl.when(j == 0)
    def _():
        ss_ref[...] = jnp.zeros_like(ss_ref)

    xf = x_ref[...].astype(jnp.float32)
    # Mask padded lanes of a partial last H tile (padding content is unspecified).
    col = j * h_block + jax.lax.broadcasted_iota(jnp.int32, xf.shape, 1)
    xf = jnp.where(col < hidden, xf, 0.0)
    ss_ref[...] += jnp.sum(xf * xf, axis=-1, keepdims=True)


def _scale_kernel(x_ref, w_ref, inv_ref, o_ref):
    o_ref[...] = (x_ref[...].astype(jnp.float32) * inv_ref[...]
                  * w_ref[...].astype(jnp.float32)).astype(o_ref.dtype)


def _rms_norm_split_h(x2, w2, eps, budget_bytes, vmem_limit, h_block=None):
    """Two-pass RMSNorm for hidden sizes whose row tile cannot fit in VMEM."""
    N, H = x2.shape
    itemsize = jnp.dtype(x2.dtype).itemsize
    br = _sublane_multiple(itemsize)

    if h_block is None:
        per_col = br * (2 * itemsize + 2 * itemsize + (4 if itemsize < 4 else 0))
        h_block = max(128, (budget_bytes // max(per_col, 1)) // 128 * 128)
    h_block = min(h_block, _round_up(H, 128))
    hg = pl.cdiv(H, h_block)
    rg = pl.cdiv(N, br)

    # Pass 1: per-row sum of squares, accumulated across H tiles (output-resident).
    ss = pl.pallas_call(
        functools.partial(_sumsq_kernel, hidden=H, h_block=h_block),
        out_shape=jax.ShapeDtypeStruct((N, 1), jnp.float32),
        grid_spec=pltpu.PrefetchScalarGridSpec(
            num_scalar_prefetch=0,
            grid=(rg, hg),
            in_specs=[pl.BlockSpec((br, h_block), lambda i, j: (i, j))],
            out_specs=pl.BlockSpec((br, 1), lambda i, j: (i, 0)),
        ),
        compiler_params=pltpu.CompilerParams(
            dimension_semantics=("parallel", "arbitrary"),
            vmem_limit_bytes=vmem_limit,
        ),
    )(x2)

    inv = jax.lax.rsqrt(ss / H + eps)  # tiny (N, 1) -> plain XLA

    # Pass 2: elementwise scale, streaming H tiles.
    out = pl.pallas_call(
        _scale_kernel,
        out_shape=jax.ShapeDtypeStruct((N, H), x2.dtype),
        grid_spec=pltpu.PrefetchScalarGridSpec(
            num_scalar_prefetch=0,
            grid=(rg, hg),
            in_specs=[
                pl.BlockSpec((br, h_block), lambda i, j: (i, j)),
                pl.BlockSpec((1, h_block), lambda i, j: (0, j)),
                pl.BlockSpec((br, 1), lambda i, j: (i, 0)),
            ],
            out_specs=pl.BlockSpec((br, h_block), lambda i, j: (i, j)),
        ),
        compiler_params=pltpu.CompilerParams(
            dimension_semantics=("parallel", "arbitrary"),
            vmem_limit_bytes=vmem_limit,
        ),
    )(x2, w2, inv)
    return out


# --------------------------------------------------------------------------- #
# Public wrapper
# --------------------------------------------------------------------------- #
def rms_norm_pallas(x, weight=None, eps=1e-8, block_rows=None):
    """RMSNorm over the last dim of x (normalized_shape == (x.shape[-1],))."""
    orig_shape = x.shape
    H = orig_shape[-1]
    x2 = x.reshape(-1, H)
    N = x2.shape[0]

    if weight is None:  # elementwise_affine=False
        weight = jnp.ones((H,), dtype=x.dtype)
    w2 = weight.reshape(1, H)

    itemsize = jnp.dtype(x.dtype).itemsize
    budget, vmem_limit, cores = _chip_config()

    if block_rows is None:
        block_rows = _pick_block_rows(N, H, itemsize, budget, cores)

    if block_rows == 0:
        # Huge hidden size: two-pass (sum-of-squares then scale) over H tiles.
        return _rms_norm_split_h(x2, w2, eps, budget, vmem_limit).reshape(orig_shape)

    grid = (pl.cdiv(N, block_rows),)  # partial last row-block masked by Pallas

    # Row axis is embarrassingly parallel. On multi-TC chips (v7x) use
    # CORE_PARALLEL so HBM streaming happens from both TensorCores; on v5e/v6e
    # plain "parallel" (single TC, no codegen effect either way).
    if cores > 1 and grid[0] >= cores:
        row_sem = getattr(pltpu, "CORE_PARALLEL", "parallel")
    else:
        row_sem = "parallel"

    out = pl.pallas_call(
        functools.partial(_rmsnorm_kernel, eps=eps),
        out_shape=jax.ShapeDtypeStruct((N, H), x.dtype),
        grid_spec=pltpu.PrefetchScalarGridSpec(
            num_scalar_prefetch=0,
            grid=grid,
            in_specs=[
                pl.BlockSpec((block_rows, H), lambda i: (i, 0)),
                pl.BlockSpec((1, H), lambda i: (0, 0)),  # weight stays VMEM-resident
            ],
            out_specs=pl.BlockSpec((block_rows, H), lambda i: (i, 0)),
        ),
        compiler_params=pltpu.CompilerParams(
            dimension_semantics=(row_sem,),
            vmem_limit_bytes=vmem_limit,
        ),
    )(x2, w2)

    return out.reshape(orig_shape)


if __name__ == "__main__":
    def ref_rms_norm(x, w, eps):
        xf = x.astype(jnp.float32)
        inv = jax.lax.rsqrt(jnp.mean(xf * xf, axis=-1, keepdims=True) + eps)
        return (xf * inv * w.astype(jnp.float32)).astype(x.dtype)

    eps = 1e-8  # matches RMSNorm.__init__ default in the module spec
    batch, seq, hidden = 2, 8, 32

    # case 1: nominal small shape, f32, weight = ones (init.ones_)
    key = jax.random.PRNGKey(0)
    x = jax.random.normal(key, (batch, seq, hidden), dtype=jnp.float32)
    weight = jnp.ones((hidden,), dtype=jnp.float32)
    y = jax.block_until_ready(rms_norm_pallas(x, weight, eps=eps))
    assert jnp.allclose(y, ref_rms_norm(x, weight, eps), atol=1e-5, rtol=1e-5)

    # case 2: row count not divisible by the tile -> masked partial last block
    x2 = jax.random.normal(jax.random.PRNGKey(1), (3, 5, hidden), dtype=jnp.float32)
    y2 = jax.block_until_ready(rms_norm_pallas(x2, weight, eps=eps))
    assert jnp.allclose(y2, ref_rms_norm(x2, weight, eps), atol=1e-5, rtol=1e-5)

    # case 3: bf16 input (f32 reduction + scale, single final downcast)
    xb = jax.random.normal(jax.random.PRNGKey(2), (batch, seq, hidden),
                           dtype=jnp.float32).astype(jnp.bfloat16)
    wb = jnp.ones((hidden,), dtype=jnp.bfloat16)
    yb = jax.block_until_ready(rms_norm_pallas(xb, wb, eps=eps))
    assert jnp.allclose(yb.astype(jnp.float32),
                        ref_rms_norm(xb, wb, eps).astype(jnp.float32),
                        atol=2e-2, rtol=2e-2)

    # case 4: exercise the split-H fallback at small scale (forced h_block so the
    # sum-of-squares accumulation over multiple H tiles is covered)
    Hs = 256
    xs = jax.random.normal(jax.random.PRNGKey(3), (16, Hs), dtype=jnp.float32)
    ws = jnp.ones((Hs,), dtype=jnp.float32)
    ys = jax.block_until_ready(
        _rms_norm_split_h(xs, ws.reshape(1, Hs), eps,
                          24 * 1024 * 1024, 32 * 1024 * 1024, h_block=128))
    assert jnp.allclose(ys, ref_rms_norm(xs, ws, eps), atol=1e-5, rtol=1e-5)

    print("KERNEL_OK")
</pallas_src>

<mosaic_0001>
module attributes {stable_mosaic.version = 11 : i64} {
  func.func @_rmsnorm_kernel(%arg0: i32, %arg1: memref<16x32xf32, #tpu.memory_space<vmem>>, %arg2: memref<1x32xf32, #tpu.memory_space<vmem>>, %arg3: memref<16x32xf32, #tpu.memory_space<vmem>>) attributes {dimension_semantics = [#tpu.dimension_semantics<parallel>], iteration_bounds = array<i64: 1>, scalar_prefetch = 0 : i64, scratch_operands = 0 : i64, tpu.core_type = #tpu.core_type<tc>, window_params = [{transform_indices = @transform_0, window_bounds = array<i64: 16, 32>}, {pipeline_mode = #tpu.pipeline_mode<synchronous>, transform_indices = @transform_1, window_bounds = array<i64: 1, 32>}, {transform_indices = @transform_2, window_bounds = array<i64: 16, 32>}]} {
    %c0 = arith.constant 0 : index
    %c0_0 = arith.constant 0 : index
    %0 = vector.load %arg1[%c0, %c0_0] : memref<16x32xf32, #tpu.memory_space<vmem>>, vector<16x32xf32>
    %1 = arith.mulf %0, %0 : vector<16x32xf32>
    %cst = arith.constant dense<0.000000e+00> : vector<16xf32>
    %2 = vector.multi_reduction <add>, %1, %cst [1] : vector<16x32xf32> to vector<16xf32>
    %3 = vector.shape_cast %2 : vector<16xf32> to vector<16x1xf32>
    %cst_1 = arith.constant 3.200000e+01 : f32
    %4 = vector.broadcast %cst_1 : f32 to vector<16x1xf32>
    %5 = arith.divf %3, %4 : vector<16x1xf32>
    %cst_2 = arith.constant 9.99999993E-9 : f32
    %6 = vector.broadcast %cst_2 : f32 to vector<16x1xf32>
    %7 = arith.addf %5, %6 : vector<16x1xf32>
    %8 = math.rsqrt %7 : vector<16x1xf32>
    %9 = vector.broadcast %8 : vector<16x1xf32> to vector<16x32xf32>
    %10 = arith.mulf %0, %9 : vector<16x32xf32>
    %c0_3 = arith.constant 0 : index
    %c0_4 = arith.constant 0 : index
    %11 = vector.load %arg2[%c0_3, %c0_4] : memref<1x32xf32, #tpu.memory_space<vmem>>, vector<1x32xf32>
    %12 = vector.broadcast %11 : vector<1x32xf32> to vector<16x32xf32>
    %13 = arith.mulf %10, %12 : vector<16x32xf32>
    %c0_5 = arith.constant 0 : index
    %c0_6 = arith.constant 0 : index
    %14 = vector.load %arg3[%c0_5, %c0_6] : memref<16x32xf32, #tpu.memory_space<vmem>>, vector<16x32xf32>
    tpu.vector_store %arg3[%c0_5, %c0_6], %13 {strides = array<i32>} : memref<16x32xf32, #tpu.memory_space<vmem>>, vector<16x32xf32>,
    return
  }
  func.func @transform_0(%arg0: i32) -> (i32, i32) {
    %c0_i32 = arith.constant 0 : i32
    %c0_i32_0 = arith.constant 0 : i32
    return %arg0, %c0_i32 : i32, i32
  }
  func.func @transform_1(%arg0: i32) -> (i32, i32) {
    %c0_i32 = arith.constant 0 : i32
    %c0_i32_0 = arith.constant 0 : i32
    %c0_i32_1 = arith.constant 0 : i32
    return %c0_i32, %c0_i32_0 : i32, i32
  }
  func.func @transform_2(%arg0: i32) -> (i32, i32) {
    %c0_i32 = arith.constant 0 : i32
    %c0_i32_0 = arith.constant 0 : i32
    return %arg0, %c0_i32 : i32, i32
  }
}

</mosaic_0001>

<llo_original>
// kernel: tpu_custom_call.1
$region0: #{tpu_custom_call.1}
  #allocation0 [shape = 'u32[]', space=smem, size = 0x4, offset = 0x4, fixed_abs, tag = 'smem constant byte address 0x4 - core index']
  #allocation1 [shape = 'u32[144,128]{1,0:T(1,128)}', space=vmem, size = 0x12000, scoped, tag = 'internal scratch']
  %s0 = inlined_call_operand.hbm [shape: f32[16,32], index: 0, kind: input, shape index: {}]
  %s1 = inlined_call_operand.hbm [shape: f32[1,32], index: 1, kind: input, shape index: {}]
  %s2 = inlined_call_operand.hbm [shape: f32[16,32], index: 2, kind: output, shape index: {}]
  %s3 = sld [smem:[#allocation0]]
  $region26: #{tpu_custom_call.1} parent=0
    _
  %s5 = ssub.s32 1, %s3
  %s6 = scalar_select 0, %s5, %s3
  $region1: #{tpu_custom_call.1} parent=0
    #allocation2 [shape = 'u8[8192]{0}', space=vmem, size = 0x2000, scoped, tag = 'input window, operand 0, single buffered']
    #allocation3 [shape = 's32[1]{0}', space=sflag, size = 0x4, scoped, tag = 'scoped memory for tpu_custom_call.1']
    #allocation4 [shape = 's32[1]{0}', space=sflag, size = 0x4, scoped, tag = 'scoped memory for tpu_custom_call.1']
    #allocation5 [shape = 'u8[512]{0}', space=vmem, size = 0x400, scoped, tag = 'input window, operand 1, single buffered']
    #allocation6 [shape = 's32[1]{0}', space=sflag, size = 0x4, scoped, tag = 'scoped memory for tpu_custom_call.1']
    #allocation7 [shape = 'u8[8192]{0}', space=vmem, size = 0x2000, scoped, tag = 'output window, operand 0, single buffered']
    %7 = vsyncpa [#allocation3], 0
    %8 = vsyncpa [#allocation6], 0
    %9 = vsyncpa [#allocation4], 0
    // Predicated region
    $region2: #{tpu_custom_call.1} parent=1 // pred_check
      _
    $region3: #{tpu_custom_call.1} parent=1 // pred_check_branch
      %11 = sbr.rel (0) target = $region5
    $region4: #{tpu_custom_call.1} parent=1 // pred_region
      %s13 = ssub.s32 256, 256
      %14 = vsyncadd [#allocation3], %s13
      %s15 = sshll.u32 [#allocation2], 4
      %s16 = int_to_ptr.vmem [resolvable:$true] %s15
      %21 = dma.hbm_to_vmem [thread:$0]  %s0, 256, %s16, [#allocation3], 128, 128, 8
    $region5: #{tpu_custom_call.1} parent=1 // pred_fallthru
      _
    // Predicated region
    $region6: #{tpu_custom_call.1} parent=1 // pred_check
      _
    $region7: #{tpu_custom_call.1} parent=1 // pred_check_branch
      %23 = sbr.rel (0) target = $region9
    $region8: #{tpu_custom_call.1} parent=1 // pred_region
      %s25 = ssub.s32 16, 16
      %26 = vsyncadd [#allocation6], %s25
      %s28 = sshll.u32 [#allocation5], 4
      %s29 = int_to_ptr.vmem [resolvable:$true] %s28
      %31 = dma.hbm_to_vmem [thread:$0]  %s1, 16, %s29, [#allocation6]
    $region9: #{tpu_custom_call.1} parent=1 // pred_fallthru
      _
    // Predicated region
    $region10: #{tpu_custom_call.1} parent=1 // pred_check
      _
    $region11: #{tpu_custom_call.1} parent=1 // pred_check_branch
      %33 = sbr.rel (0) target = $region13
    $region12: #{tpu_custom_call.1} parent=1 // pred_region
      %34 = dma.done [#allocation3], 256
    $region13: #{tpu_custom_call.1} parent=1 // pred_fallthru
      _
    // Predicated region
    $region14: #{tpu_custom_call.1} parent=1 // pred_check
      _
    $region15: #{tpu_custom_call.1} parent=1 // pred_check_branch
      %36 = sbr.rel (0) target = $region17
    $region16: #{tpu_custom_call.1} parent=1 // pred_region
      %37 = dma.done [#allocation6], 16
    $region17: #{tpu_custom_call.1} parent=1 // pred_fallthru
      _
    %v38 = vld [vmem:[#allocation2] sm:$0xff]
    %v39 = vld [vmem:[#allocation2 + $0x8] sm:$0xff]
    %v40 = vmul.f32 %v38, %v38
    %v41 = vmul.f32 %v39, %v39
    %vm42 = vcmask 261120
    %v43 = vsel %vm42, %v40, 0.0
    %44 = vadd.xlane.f32.xlu0 %v43
    %v45 = vpop.xlane.xlu0 %44
    %v46 = vsel %vm42, %v41, 0.0
    %47 = vadd.xlane.f32.xlu0 %v46
    %v48 = vpop.xlane.xlu0 %47
    %v49 = vrcp.pop 32.0
    %v50 = vmul.f32 %v45, %v49
    %v51 = vmul.f32 %v48, %v49
    %v52 = vadd.f32 %v50, 1e-08
    %v53 = vadd.f32 %v51, 1e-08
    %v54 = vrsqrt.pop %v52
    %v55 = vrsqrt.pop %v53
    %v56 = vmul.f32 %v38, %v54
    %v57 = vmul.f32 %v39, %v55
    %v58 = vld [vmem:[#allocation5] sm:$0x1]
    %v60 = vlaneseq
    %v61 = vshrl.u32 %v60, 7
    %v62 = vsub.s32 0, %v61
    %v63 = vrot.slane %v58, %v62
    %v65 = vmul.f32 %v56, %v63
    %v66 = vmul.f32 %v57, %v63
    %67 = vst.msk [vmem:[#allocation7] sm:$0xff] %vm42, %v65
    %68 = vst.msk [vmem:[#allocation7 + $0x8] sm:$0xff] %vm42, %v66
    // Predicated region
    $region18: #{tpu_custom_call.1} parent=1 // pred_check
      _
    $region19: #{tpu_custom_call.1} parent=1 // pred_check_branch
      %70 = sbr.rel (0) target = $region21
    $region20: #{tpu_custom_call.1} parent=1 // pred_region
      %s72 = ssub.s32 256, 256
      %73 = vsyncadd [#allocation4], %s72
      %s74 = sshll.u32 [#allocation7], 4
      %s75 = int_to_ptr.vmem [resolvable:$true] %s74
      %80 = dma.vmem_to_hbm [thread:$0]  %s75, 256, %s2, [#allocation4], 128, 128, 8
    $region21: #{tpu_custom_call.1} parent=1 // pred_fallthru
      _
    // Predicated region
    $region22: #{tpu_custom_call.1} parent=1 // pred_check
      _
    $region23: #{tpu_custom_call.1} parent=1 // pred_check_branch
      %82 = sbr.rel (0) target = $region25
    $region24: #{tpu_custom_call.1} parent=1 // pred_region
      %83 = dma.done [#allocation4], 256
    $region25: #{tpu_custom_call.1} parent=1 // pred_fallthru
      _
    %84 = vsyncpa [#allocation3], 1
    %85 = vsyncpa [#allocation6], 1
    %86 = vsyncpa [#allocation4], 1

</llo_original>
